<compile_context>
chip_gen: v6e
topology: v6e:2x2x1
jax: 0.10.0
libtpu: 0.0.40
codegen_flags: <defaults>
</compile_context>

<pallas_src>
import functools

import jax
import jax.numpy as jnp
from jax.experimental import pallas as pl
from jax.experimental.pallas import tpu as pltpu


K_IN = 180      # flattened input features (x.view(B, -1))
N_OUT = 7       # logits
N_LANES = 128   # lane-dense width of the fused weight / accumulator
TB_MAX = 1024   # max batch-tile rows (double-buffered VMEM stays tiny: ~2*1024*180*2 B)


def _round_up(n, m):
    return ((n + m - 1) // m) * m


def _fused_linear_kernel(x_ref, w_ref, b_ref, o_ref):
    # x: (TB, 180) bf16   w: (180, 128) bf16   b: (1, 128) f32   o: (TB, 7) f32
    acc = jnp.dot(x_ref[...], w_ref[...], preferred_element_type=jnp.float32)  # MXU, f32 acc
    out = acc + b_ref[...]                                                     # broadcast add
    o_ref[...] = out[:, :N_OUT].astype(o_ref.dtype)                            # narrow writeback


def fuse_params(params):
    """Collapse the 4 affine layers into one fused weight/bias. Call ONCE at init.

    Returns (w_fused (180,128) bf16 lane-padded, b_fused (1,128) f32 lane-padded)."""
    (w1, b1), (w2, b2), (w3, b3), (w4, b4) = params
    dot = functools.partial(jnp.dot, precision=jax.lax.Precision.HIGHEST)
    w = dot(dot(dot(w1, w2), w3), w4)                    # (180, 7)
    b = dot(dot(dot(b1, w2) + b2, w3) + b3, w4) + b4     # (1, 7)
    w_pad = (
        jnp.zeros((K_IN, N_LANES), jnp.float32).at[:, :N_OUT].set(w).astype(jnp.bfloat16)
    )
    b_pad = jnp.zeros((1, N_LANES), jnp.float32).at[:, :N_OUT].set(b)
    return w_pad, b_pad


def _choose_tb(B):
    """Batch tile: block == full batch for tiny B; otherwise >=2 grid steps (v7x megacore),
    multiple of 16 (bf16 sublane packing), capped at TB_MAX."""
    if B <= 32:
        return B
    return min(TB_MAX, _round_up(pl.cdiv(B, 2), 16))


@jax.jit
def linear_classifier(x, fused_w, fused_b):
    """x: (B, ...) whose trailing dims flatten to 180. Returns (B, 7) float32 logits."""
    B = x.shape[0]
    x2d = x.reshape(B, -1)
    assert x2d.shape[1] == K_IN, f"expected {K_IN} features, got {x2d.shape[1]}"
    x_bf = x2d.astype(jnp.bfloat16)   # halve the dominant HBM stream; no feature re-pad

    TB = _choose_tb(B)
    grid = (pl.cdiv(B, TB),)          # partial last block instead of batch padding

    out = pl.pallas_call(
        _fused_linear_kernel,
        out_shape=jax.ShapeDtypeStruct((B, N_OUT), jnp.float32),
        grid_spec=pltpu.PrefetchScalarGridSpec(
            num_scalar_prefetch=0,
            grid=grid,
            in_specs=[
                pl.BlockSpec((TB, K_IN), lambda i: (i, 0)),       # x tile, last dim = full 180
                pl.BlockSpec((K_IN, N_LANES), lambda i: (0, 0)),  # fused weight, resident
                pl.BlockSpec((1, N_LANES), lambda i: (0, 0)),     # fused bias, resident
            ],
            out_specs=pl.BlockSpec((TB, N_OUT), lambda i: (i, 0)),  # last dim = full 7
        ),
        compiler_params=pltpu.CompilerParams(
            dimension_semantics=("parallel",),   # shards the batch grid across v7x's 2 TCs
        ),
        cost_estimate=pl.CostEstimate(
            flops=2 * B * K_IN * N_LANES,
            transcendentals=0,
            bytes_accessed=(2 * B * K_IN            # bf16 activations
                            + 2 * K_IN * N_LANES    # bf16 fused weight
                            + 4 * N_LANES           # f32 bias
                            + 4 * B * N_OUT),       # f32 logits
        ),
    )(x_bf, fused_w, fused_b)
    return out


def init_params(key):
    """Deterministic init mirroring nn.Linear's U(-1/sqrt(fan_in), 1/sqrt(fan_in))."""
    dims = [(180, 256), (256, 128), (128, 32), (32, 7)]
    params = []
    for (fan_in, fan_out) in dims:
        key, kw, kb = jax.random.split(key, 3)
        bound = 1.0 / jnp.sqrt(fan_in)
        # stored as (in, out) so the math is x @ W + b (transpose of nn.Linear's (out, in))
        w = jax.random.uniform(kw, (fan_in, fan_out), jnp.float32, -bound, bound)
        b = jax.random.uniform(kb, (1, fan_out), jnp.float32, -bound, bound)
        params.append((w, b))
    return params


def _reference(x, params):
    """Chained (un-fused) f32 forward, matching the PyTorch module layer-by-layer."""
    h = x.reshape(x.shape[0], -1)
    for (w, b) in params:
        h = jnp.dot(h, w, precision=jax.lax.Precision.HIGHEST) + b
    return h


if __name__ == "__main__":
    key = jax.random.PRNGKey(0)
    key, kx = jax.random.split(key)

    # batch=2, 180 input features (the view(B, -1) in forward implies 180 per sample)
    x = jax.random.normal(kx, (2, 180), jnp.float32)
    params = init_params(key)

    # Fusion + padding done once, outside the per-call path.
    fused_w, fused_b = fuse_params(params)

    out = linear_classifier(x, fused_w, fused_b)
    out = jax.block_until_ready(out)

    ref = _reference(x, params)
    assert out.shape == (2, 7), f"bad output shape {out.shape}"
    # bf16 activation/weight streaming -> relax tolerance vs the f32 reference chain.
    assert jnp.allclose(out, ref, atol=3e-2, rtol=3e-2), "mismatch vs reference"

    print("KERNEL_OK")
</pallas_src>

<mosaic_0001>
module attributes {stable_mosaic.version = 11 : i64} {
  func.func @_fused_linear_kernel(%arg0: i32, %arg1: memref<2x180xbf16, #tpu.memory_space<vmem>>, %arg2: memref<180x128xbf16, #tpu.memory_space<vmem>>, %arg3: memref<1x128xf32, #tpu.memory_space<vmem>>, %arg4: memref<2x7xf32, #tpu.memory_space<vmem>>) attributes {dimension_semantics = [#tpu.dimension_semantics<parallel>], iteration_bounds = array<i64: 1>, scalar_prefetch = 0 : i64, scratch_operands = 0 : i64, tpu.core_type = #tpu.core_type<tc>, window_params = [{transform_indices = @transform_0, window_bounds = array<i64: 2, 180>}, {pipeline_mode = #tpu.pipeline_mode<synchronous>, transform_indices = @transform_1, window_bounds = array<i64: 180, 128>}, {pipeline_mode = #tpu.pipeline_mode<synchronous>, transform_indices = @transform_2, window_bounds = array<i64: 1, 128>}, {transform_indices = @transform_3, window_bounds = array<i64: 2, 7>}]} {
    %c0 = arith.constant 0 : index
    %c0_0 = arith.constant 0 : index
    %0 = vector.load %arg1[%c0, %c0_0] : memref<2x180xbf16, #tpu.memory_space<vmem>>, vector<2x180xbf16>
    %c0_1 = arith.constant 0 : index
    %c0_2 = arith.constant 0 : index
    %1 = vector.load %arg2[%c0_1, %c0_2] : memref<180x128xbf16, #tpu.memory_space<vmem>>, vector<180x128xbf16>
    %cst = arith.constant dense<0.000000e+00> : vector<2x128xf32>
    %2 = tpu.matmul %0, %1, %cst {dimension_numbers = #tpu.dot_dimension_numbers<[1], [0], [0], [1], [0, 0, 1, 1], [], []>} : vector<2x180xbf16>, vector<180x128xbf16>, vector<2x128xf32> -> vector<2x128xf32>
    %c0_3 = arith.constant 0 : index
    %c0_4 = arith.constant 0 : index
    %3 = vector.load %arg3[%c0_3, %c0_4] : memref<1x128xf32, #tpu.memory_space<vmem>>, vector<1x128xf32>
    %4 = vector.broadcast %3 : vector<1x128xf32> to vector<2x128xf32>
    %5 = arith.addf %2, %4 : vector<2x128xf32>
    %6 = vector.extract_strided_slice %5 {offsets = [0, 0], sizes = [2, 7], strides = [1, 1]} : vector<2x128xf32> to vector<2x7xf32>
    %c0_5 = arith.constant 0 : index
    %c0_6 = arith.constant 0 : index
    %7 = vector.load %arg4[%c0_5, %c0_6] : memref<2x7xf32, #tpu.memory_space<vmem>>, vector<2x7xf32>
    tpu.vector_store %arg4[%c0_5, %c0_6], %6 {strides = array<i32>} : memref<2x7xf32, #tpu.memory_space<vmem>>, vector<2x7xf32>,
    return
  }
  func.func @transform_0(%arg0: i32) -> (i32, i32) {
    %c0_i32 = arith.constant 0 : i32
    %c0_i32_0 = arith.constant 0 : i32
    return %arg0, %c0_i32 : i32, i32
  }
  func.func @transform_1(%arg0: i32) -> (i32, i32) {
    %c0_i32 = arith.constant 0 : i32
    %c0_i32_0 = arith.constant 0 : i32
    %c0_i32_1 = arith.constant 0 : i32
    return %c0_i32, %c0_i32_0 : i32, i32
  }
  func.func @transform_2(%arg0: i32) -> (i32, i32) {
    %c0_i32 = arith.constant 0 : i32
    %c0_i32_0 = arith.constant 0 : i32
    %c0_i32_1 = arith.constant 0 : i32
    return %c0_i32, %c0_i32_0 : i32, i32
  }
  func.func @transform_3(%arg0: i32) -> (i32, i32) {
    %c0_i32 = arith.constant 0 : i32
    %c0_i32_0 = arith.constant 0 : i32
    return %arg0, %c0_i32 : i32, i32
  }
}

</mosaic_0001>

<llo_original>
// kernel: linear_classifier.1
$region0: #{linear_classifier.1}
  #allocation0 [shape = 'u32[]', space=smem, size = 0x4, offset = 0x4, fixed_abs, tag = 'smem constant byte address 0x4 - core index']
  #allocation1 [shape = 'u32[144,128]{1,0:T(1,128)}', space=vmem, size = 0x12000, scoped, tag = 'internal scratch']
  %s0 = inlined_call_operand.vmem [shape: bf16[2,180], index: 0, kind: input, shape index: {}]
  %s1 = inlined_call_operand.hbm [shape: bf16[180,128], index: 1, kind: input, shape index: {}]
  %s2 = inlined_call_operand.vmem [shape: f32[1,128], index: 2, kind: input, shape index: {}]
  %s3 = inlined_call_operand.hbm [shape: f32[2,7], index: 3, kind: output, shape index: {}]
  %s4 = sld [smem:[#allocation0]]
  $region26: #{linear_classifier.1} parent=0
    _
  %s6 = ssub.s32 1, %s4
  %s7 = scalar_select 0, %s6, %s4
  $region1: #{linear_classifier.1} parent=0
    #allocation2 [shape = 'u8[47104]{0}', space=vmem, size = 0xb800, scoped, tag = 'input window, operand 1, single buffered']
    #allocation3 [shape = 's32[1]{0}', space=sflag, size = 0x4, scoped, tag = 'scoped memory for linear_classifier.1']
    #allocation4 [shape = 's32[1]{0}', space=sflag, size = 0x4, scoped, tag = 'scoped memory for linear_classifier.1']
    #allocation5 [shape = 'u8[1024]{0}', space=vmem, size = 0x400, scoped, tag = 'output window, operand 0, single buffered']
    %8 = vsyncpa [#allocation3], 0
    %9 = vsyncpa [#allocation4], 0
    // Predicated region
    $region2: #{linear_classifier.1} parent=1 // pred_check
      _
    $region3: #{linear_classifier.1} parent=1 // pred_check_branch
      %11 = sbr.rel (0) target = $region5
    $region4: #{linear_classifier.1} parent=1 // pred_region
      _
    $region5: #{linear_classifier.1} parent=1 // pred_fallthru
      _
    // Predicated region
    $region6: #{linear_classifier.1} parent=1 // pred_check
      _
    $region7: #{linear_classifier.1} parent=1 // pred_check_branch
      %13 = sbr.rel (0) target = $region9
    $region8: #{linear_classifier.1} parent=1 // pred_region
      %s15 = ssub.s32 1472, 1472
      %16 = vsyncadd [#allocation3], %s15
      %s17 = sshll.u32 [#allocation2], 4
      %s18 = int_to_ptr.vmem [resolvable:$true] %s17
      %23 = dma.hbm_to_vmem [thread:$0]  %s1, 1472, %s18, [#allocation3], 64, 64, 4
    $region9: #{linear_classifier.1} parent=1 // pred_fallthru
      _
    // Predicated region
    $region10: #{linear_classifier.1} parent=1 // pred_check
      _
    $region11: #{linear_classifier.1} parent=1 // pred_check_branch
      %25 = sbr.rel (0) target = $region13
    $region12: #{linear_classifier.1} parent=1 // pred_region
      _
    $region13: #{linear_classifier.1} parent=1 // pred_fallthru
      _
    // Predicated region
    $region14: #{linear_classifier.1} parent=1 // pred_check
      _
    $region15: #{linear_classifier.1} parent=1 // pred_check_branch
      %27 = sbr.rel (0) target = $region17
    $region16: #{linear_classifier.1} parent=1 // pred_region
      %28 = dma.done [#allocation3], 1472
    $region17: #{linear_classifier.1} parent=1 // pred_fallthru
      _
    %v30 = vld [vmem:[%s0] sm:$0x3]
    %v31 = vld [vmem:[#allocation2] sm:$0xf]
    %v32 = vld [vmem:[#allocation2 + $0x4] sm:$0xf]
    %v33 = vld [vmem:[#allocation2 + $0x8] sm:$0xf]
    %v34 = vld [vmem:[#allocation2 + $0xc] sm:$0xf]
    %v35 = vld [vmem:[#allocation2 + $0x10] sm:$0xf]
    %v36 = vld [vmem:[#allocation2 + $0x14] sm:$0xf]
    %v37 = vld [vmem:[#allocation2 + $0x18] sm:$0xf]
    %v38 = vld [vmem:[#allocation2 + $0x1c] sm:$0xf]
    %v39 = vld [vmem:[#allocation2 + $0x20] sm:$0xf]
    %v40 = vld [vmem:[#allocation2 + $0x24] sm:$0xf]
    %v41 = vld [vmem:[#allocation2 + $0x28] sm:$0xf]
    %v42 = vld [vmem:[#allocation2 + $0x2c] sm:$0xf]
    %v43 = vld [vmem:[#allocation2 + $0x30] sm:$0xf]
    %v44 = vld [vmem:[#allocation2 + $0x34] sm:$0xf]
    %v45 = vld [vmem:[#allocation2 + $0x38] sm:$0xf]
    %v46 = vld [vmem:[#allocation2 + $0x3c] sm:$0xf]
    %v47 = vld [vmem:[#allocation2 + $0x40] sm:$0xf]
    %v48 = vld [vmem:[#allocation2 + $0x44] sm:$0xf]
    %v49 = vld [vmem:[#allocation2 + $0x48] sm:$0xf]
    %v50 = vld [vmem:[#allocation2 + $0x4c] sm:$0xf]
    %v51 = vld [vmem:[#allocation2 + $0x50] sm:$0xf]
    %v52 = vld [vmem:[#allocation2 + $0x54] sm:$0xf]
    %v53 = vld [vmem:[#allocation2 + $0x58] sm:$0x3]
    %v54 = vld [vmem:[%s2] sm:$0x1]
    %v56 = vlaneseq
    %v57 = vshrl.u32 %v56, 7
    %v58 = vsub.s32 0, %v57
    %v59 = vrot.slane %v54, %v58
    %v63 = vunpack.c.l.s4 1966171168
    %v64 = vunpack.c.0.s8 %v63
    %v65 = vlaneseq
    %v66 = vshrl.u32 %v65, 7
    %v67 = vsub.s32 %v64, %v66
    %v68 = vrot.slane %v30, %v67
    %v69 = vcombine.high %v68, %v68
    %v71 = vunpack.c.l.s4 1966171168
    %v72 = vunpack.c.0.s8 %v71
    %v73 = vlaneseq
    %v74 = vshrl.u32 %v73, 7
    %v75 = vsub.s32 %v72, %v74
    %v76 = vrot.slane %v68, %v75
    %v78 = vunpack.c.l.s4 1966171168
    %v79 = vunpack.c.0.s8 %v78
    %v80 = vlaneseq
    %v81 = vshrl.u32 %v80, 7
    %v82 = vsub.s32 %v79, %v81
    %v83 = vrot.slane %v69, %v82
    %v108 = vunpack.c.l.b16 %v31
    %v109 = vunpack.c.l.b16 %v32
    %v110 = vunpack.c.l.b16 %v33
    %v111 = vunpack.c.l.b16 %v34
    %v112 = vunpack.c.l.b16 %v35
    %v113 = vunpack.c.l.b16 %v36
    %v114 = vunpack.c.l.b16 %v37
    %v115 = vunpack.c.l.b16 %v38
    %v116 = vunpack.c.l.b16 %v39
    %v117 = vunpack.c.l.b16 %v40
    %v118 = vunpack.c.l.b16 %v41
    %v119 = vunpack.c.l.b16 %v42
    %v120 = vunpack.c.l.b16 %v43
    %v121 = vunpack.c.l.b16 %v44
    %v122 = vunpack.c.l.b16 %v45
    %v123 = vunpack.c.l.b16 %v46
    %v124 = vunpack.c.l.b16 %v47
    %v125 = vunpack.c.l.b16 %v48
    %v126 = vunpack.c.l.b16 %v49
    %v127 = vunpack.c.l.b16 %v50
    %v128 = vunpack.c.l.b16 %v51
    %v129 = vunpack.c.l.b16 %v52
    %v130 = vunpack.c.l.b16 %v53
    %v131 = vpack.c.b16 %v109, %v108
    %v132 = vpack.c.b16 %v111, %v110
    %v133 = vpack.c.b16 %v113, %v112
    %v134 = vpack.c.b16 %v115, %v114
    %v135 = vpack.c.b16 %v117, %v116
    %v136 = vpack.c.b16 %v119, %v118
    %v137 = vpack.c.b16 %v121, %v120
    %v138 = vpack.c.b16 %v123, %v122
    %v139 = vpack.c.b16 %v125, %v124
    %v140 = vpack.c.b16 %v127, %v126
    %v141 = vpack.c.b16 %v129, %v128
    %v142 = vpack.c.b16 %v130, %v130
    %vm154 = vcmask 424960
    %v156 = vsel %vm154, %v83, 0
    %vm158 = vcmask 1041408
    %v160 = vsel %vm158, %v142, 0
    %162 = vmatprep.subr.bf16.mxu0 0
    %163 = vmatpush1.bf16.msra.mxu0 %v138
    %164 = vmatprep.subr.bf16.mxu0 0
    %165 = vmatpush1.bf16.msra.mxu0 %v137
    %166 = vmatprep.subr.bf16.mxu0 0
    %167 = vmatpush1.bf16.msra.mxu0 %v136
    %168 = vmatprep.subr.bf16.mxu0 0
    %169 = vmatpush1.bf16.msra.mxu0 %v135
    %170 = vmatprep.subr.bf16.mxu0 0
    %171 = vmatpush1.bf16.msra.mxu0 %v134
    %172 = vmatprep.subr.bf16.mxu0 0
    %173 = vmatpush1.bf16.msra.mxu0 %v133
    %174 = vmatprep.subr.bf16.mxu0 0
    %175 = vmatpush1.bf16.msra.mxu0 %v132
    %176 = vmatprep.subr.bf16.mxu0 0
    %177 = vmatpush1.bf16.msra.mxu0 %v131
    %178 = vmatprep.subr.bf16.mxu0 0
    %179 = vmatpush2.bf16.msra.mxu0 0
    %180 = vmatprep.subr.bf16.mxu0 0
    %181 = vmatpush2.bf16.msra.mxu0 0
    %182 = vmatprep.subr.bf16.mxu0 0
    %183 = vmatpush2.bf16.msra.mxu0 0
    %184 = vmatprep.subr.bf16.mxu0 0
    %185 = vmatpush2.bf16.msra.mxu0 0
    %186 = vmatprep.subr.bf16.mxu0 0
    %187 = vmatpush2.bf16.msra.mxu0 %v160
    %188 = vmatprep.subr.bf16.mxu0 0
    %189 = vmatpush2.bf16.msra.mxu0 %v141
    %190 = vmatprep.subr.bf16.mxu0 0
    %191 = vmatpush2.bf16.msra.mxu0 %v140
    %192 = vmatprep.subr.bf16.mxu0 0
    %193 = vmatpush2.bf16.msra.mxu0 %v139
    %194 = vmatprep.mubr.bf16.mxu0 %v156
    %195 = vmatmul.mubr.bf16.gmra.mxu0 %v76
    %v196 = vpop.f32.mrf.mxu0
    %v197 = vadd.f32 %v59, %v196
    %v198 = vpop.f32.mrf.mxu0
    %v199 = vpop.f32.mrf.mxu0
    %v200 = vpop.f32.mrf.mxu0
    %201 = vdwg.mxu0
    %vm202 = vcmask 50176
    %203 = vst.msk [vmem:[#allocation5] sm:$0x3] %vm202, %v197
    // Predicated region
    $region18: #{linear_classifier.1} parent=1 // pred_check
      _
    $region19: #{linear_classifier.1} parent=1 // pred_check_branch
      %205 = sbr.rel (0) target = $region21
    $region20: #{linear_classifier.1} parent=1 // pred_region
      %s207 = ssub.s32 32, 32
      %208 = vsyncadd [#allocation4], %s207
      %s210 = sshll.u32 [#allocation5], 4
      %s211 = int_to_ptr.vmem [resolvable:$true] %s210
      %213 = dma.vmem_to_hbm [thread:$0]  %s211, 32, %s3, [#allocation4]
    $region21: #{linear_classifier.1} parent=1 // pred_fallthru
      _
    // Predicated region
    $region22: #{linear_classifier.1} parent=1 // pred_check
      _
    $region23: #{linear_classifier.1} parent=1 // pred_check_branch
      %215 = sbr.rel (0) target = $region25
    $region24: #{linear_classifier.1} parent=1 // pred_region
      %216 = dma.done [#allocation4], 32
    $region25: #{linear_classifier.1} parent=1 // pred_fallthru
      _
    %217 = vsyncpa [#allocation3], 1
    %218 = vsyncpa [#allocation4], 1

</llo_original>
